<compile_context>
chip_gen: v7x
topology: tpu7x:2x2x1
jax: 0.10.0
libtpu: 0.0.40
codegen_flags: <defaults>
</compile_context>

<pallas_src>
import functools

import jax
import jax.numpy as jnp
from jax import lax
from jax.experimental import pallas as pl
from jax.experimental.pallas import tpu as pltpu


# ----------------------------------------------------------------------------
# Fused Pallas kernel
# ----------------------------------------------------------------------------
def _rdb_fused_kernel(x_ref, masks_ref, *refs, n_layers, width):
    """Fused RDB for one batch element, channels-as-sublanes / spatial-as-lanes.

    x_ref    : (1, C0, HW)   block input (residual), f32
    masks_ref: (2, HW)       column-validity masks (row 0: dw=-1, row 1: dw=+1), f32
    refs     : [w_0 .. w_{L-1}]  tap-stacked dense weights, each (9*growth, Cin_l)
               w1x1_ref (C0, C_final)  1x1 weights with `scale` pre-folded
               o_ref    (1, C0, HW)    output block
               feat_ref (C_final, HW)  VMEM scratch holding the growing feature map
    """
    w_refs = refs[:n_layers]
    w1x1_ref = refs[n_layers]
    o_ref = refs[n_layers + 1]
    feat_ref = refs[n_layers + 2]

    c0 = x_ref.shape[1]

    x_val = x_ref[0]                                   # (C0, HW), f32
    feat_ref[0:c0, :] = x_val.astype(feat_ref.dtype)

    mask_m1 = masks_ref[0:1, :]                        # valid where col > 0     (dw=-1)
    mask_p1 = masks_ref[1:2, :]                        # valid where col < W - 1 (dw=+1)

    def shift_flat(a, offset):
        # b[:, p] = a[:, p + offset], zero-filled where p + offset is out of range.
        if offset == 0:
            return a
        c = a.shape[0]
        zeros = jnp.zeros((c, abs(offset)), a.dtype)
        if offset > 0:
            return jnp.concatenate([a[:, offset:], zeros], axis=1)
        return jnp.concatenate([zeros, a[:, :offset]], axis=1)

    cin = c0
    for layer in range(n_layers):
        wmat_ref = w_refs[layer]                       # (9*growth, cin)
        growth = wmat_ref.shape[0] // 9
        f = feat_ref[0:cin, :]                         # (cin, HW)

        # One MXU matmul per layer: all 9 taps stacked along the output (M) dim.
        # Row block t (tap (dh, dw) = (kh-1, kw-1)) == conv partial products that
        # must be read from flat position p + dh*W + dw.
        y_all = jnp.dot(wmat_ref[...], f, preferred_element_type=jnp.float32)

        acc = None
        for dh in (-1, 0, 1):
            row = None
            for dw in (-1, 0, 1):
                t = (dh + 1) * 3 + (dw + 1)
                chunk = y_all[t * growth:(t + 1) * growth, :]
                if dw == -1:
                    chunk = shift_flat(chunk, -1) * mask_m1
                elif dw == 1:
                    chunk = shift_flat(chunk, 1) * mask_p1
                row = chunk if row is None else row + chunk
            if dh != 0:
                # Column masks commute with the row shift; out-of-range rows fall
                # off the flat ends and are zero-filled.
                row = shift_flat(row, dh * width)
            acc = row if acc is None else acc + row

        out = jnp.maximum(acc, 0.0)                    # ReLU in f32
        feat_ref[cin:cin + growth, :] = out.astype(feat_ref.dtype)
        cin += growth

    # Final 1x1 conv (scale already folded into the weights) + residual, in f32.
    y = jnp.dot(w1x1_ref[...], feat_ref[...], preferred_element_type=jnp.float32)
    o_ref[0] = (y + x_val.astype(jnp.float32)).astype(o_ref.dtype)


# ----------------------------------------------------------------------------
# Wrapper
# ----------------------------------------------------------------------------
def rdb_forward(x, dense_w_mats, w1x1_scaled):
    """x: (N, C0, H, W) NCHW.  dense_w_mats[l]: (9*growth, Cin_l) tap-stacked weights
    in the compute dtype.  w1x1_scaled: (C0, C_final) with `scale` folded in."""
    n, c0, h, w = x.shape
    hw = h * w
    compute_dtype = w1x1_scaled.dtype
    c_final = w1x1_scaled.shape[1]
    n_layers = len(dense_w_mats)

    x_flat = x.reshape(n, c0, hw)                      # free reshape (contiguous)
    col = jnp.arange(hw, dtype=jnp.int32) % w
    masks = jnp.stack([col > 0, col < w - 1]).astype(jnp.float32)   # (2, HW)

    kernel = functools.partial(_rdb_fused_kernel, n_layers=n_layers, width=w)

    in_specs = [
        pl.BlockSpec((1, c0, hw), lambda b: (b, 0, 0)),
        pl.BlockSpec((2, hw), lambda b: (0, 0)),
    ]
    in_specs += [pl.BlockSpec(wm.shape, lambda b: (0, 0)) for wm in dense_w_mats]
    in_specs += [pl.BlockSpec(w1x1_scaled.shape, lambda b: (0, 0))]

    out = pl.pallas_call(
        kernel,
        out_shape=jax.ShapeDtypeStruct((n, c0, hw), x.dtype),
        grid=(n,),
        in_specs=in_specs,
        out_specs=pl.BlockSpec((1, c0, hw), lambda b: (b, 0, 0)),
        scratch_shapes=[pltpu.VMEM((c_final, hw), compute_dtype)],
        compiler_params=pltpu.CompilerParams(dimension_semantics=("parallel",)),
    )(x_flat, masks, *dense_w_mats, w1x1_scaled)
    return out.reshape(n, c0, h, w)


# ----------------------------------------------------------------------------
# One-time host-side weight repack (PyTorch OIHW -> kernel layout, scale folded)
# ----------------------------------------------------------------------------
def prepare_kernel_weights(dense_oihw, w1x1_oihw, scale, compute_dtype):
    w_mats = []
    for w in dense_oihw:
        cout, cin = w.shape[0], w.shape[1]
        # (Cout, Cin, kh, kw) -> (kh, kw, Cout, Cin) -> (9*Cout, Cin); tap (kh, kw)
        # row-block order matches the in-kernel chunk slicing / shift order.
        wm = jnp.transpose(w, (2, 3, 0, 1)).reshape(9 * cout, cin)
        w_mats.append(wm.astype(compute_dtype))
    w1 = (w1x1_oihw[:, :, 0, 0] * scale).astype(compute_dtype)   # fold scale once
    return w_mats, w1


# ----------------------------------------------------------------------------
# Pure-JAX reference (PyTorch semantics, NCHW / OIHW)
# ----------------------------------------------------------------------------
def rdb_reference(x, dense_oihw, w1x1_oihw, scale):
    dn = ("NCHW", "OIHW", "NCHW")
    feat = x
    for w in dense_oihw:
        y = lax.conv_general_dilated(feat, w, (1, 1), "SAME", dimension_numbers=dn)
        feat = jnp.concatenate([feat, jnp.maximum(y, 0.0)], axis=1)
    out = lax.conv_general_dilated(feat, w1x1_oihw, (1, 1), "SAME",
                                   dimension_numbers=dn)
    return out * scale + x


# ----------------------------------------------------------------------------
# Parameter init (matching RDB(nChannels, nDenselayer, growthRate), bias=False)
# ----------------------------------------------------------------------------
def make_rdb_params(key, n_channels, n_dense, growth_rate):
    dense = []
    c = n_channels
    for _ in range(n_dense):
        key, sub = jax.random.split(key)
        dense.append(jax.random.normal(sub, (growth_rate, c, 3, 3), jnp.float32) * 0.1)
        c += growth_rate
    key, sub = jax.random.split(key)
    w1 = jax.random.normal(sub, (n_channels, c, 1, 1), jnp.float32) * 0.1
    return dense, w1


# ----------------------------------------------------------------------------
# Main
# ----------------------------------------------------------------------------
if __name__ == "__main__":
    n_channels, n_dense, growth_rate, scale = 4, 3, 4, 1.0
    N, H, W = 2, 16, 16

    key = jax.random.PRNGKey(0)
    key, kx = jax.random.split(key)
    x = jax.random.normal(kx, (N, n_channels, H, W), jnp.float32)   # NCHW

    dense_oihw, w1_oihw = make_rdb_params(key, n_channels, n_dense, growth_rate)
    ref = jax.block_until_ready(rdb_reference(x, dense_oihw, w1_oihw, scale))

    # f32 operands (tight correctness check)
    wm32, w1_32 = prepare_kernel_weights(dense_oihw, w1_oihw, scale, jnp.float32)
    out32 = jax.block_until_ready(rdb_forward(x, wm32, w1_32))
    assert out32.shape == (N, n_channels, H, W)
    assert jnp.allclose(out32, ref, atol=5e-3, rtol=5e-3)

    # bf16 operands / f32 accumulation (perf configuration; looser check)
    wmbf, w1_bf = prepare_kernel_weights(dense_oihw, w1_oihw, scale, jnp.bfloat16)
    outbf = jax.block_until_ready(rdb_forward(x, wmbf, w1_bf))
    assert jnp.allclose(outbf, ref, atol=1e-1, rtol=1e-1)

    print("KERNEL_OK")
</pallas_src>

<mosaic_0001>
module attributes {stable_mosaic.version = 11 : i64} {
  func.func @_rdb_fused_kernel(%arg0: i32, %arg1: memref<1x4x256xf32, #tpu.memory_space<vmem>>, %arg2: memref<2x256xf32, #tpu.memory_space<vmem>>, %arg3: memref<36x4xf32, #tpu.memory_space<vmem>>, %arg4: memref<36x8xf32, #tpu.memory_space<vmem>>, %arg5: memref<36x12xf32, #tpu.memory_space<vmem>>, %arg6: memref<4x16xf32, #tpu.memory_space<vmem>>, %arg7: memref<1x4x256xf32, #tpu.memory_space<vmem>>, %arg8: memref<16x256xf32, #tpu.memory_space<vmem>>) attributes {dimension_semantics = [#tpu.dimension_semantics<parallel>], iteration_bounds = array<i64: 2>, scalar_prefetch = 0 : i64, scratch_operands = 1 : i64, tpu.core_type = #tpu.core_type<tc>, window_params = [{transform_indices = @transform_0, window_bounds = array<i64: 1, 4, 256>}, {pipeline_mode = #tpu.pipeline_mode<synchronous>, transform_indices = @transform_1, window_bounds = array<i64: 2, 256>}, {pipeline_mode = #tpu.pipeline_mode<synchronous>, transform_indices = @transform_2, window_bounds = array<i64: 36, 4>}, {pipeline_mode = #tpu.pipeline_mode<synchronous>, transform_indices = @transform_3, window_bounds = array<i64: 36, 8>}, {pipeline_mode = #tpu.pipeline_mode<synchronous>, transform_indices = @transform_4, window_bounds = array<i64: 36, 12>}, {pipeline_mode = #tpu.pipeline_mode<synchronous>, transform_indices = @transform_5, window_bounds = array<i64: 4, 16>}, {transform_indices = @transform_6, window_bounds = array<i64: 1, 4, 256>}]} {
    %c0 = arith.constant 0 : index
    %c0_0 = arith.constant 0 : index
    %c0_1 = arith.constant 0 : index
    %0 = vector.load %arg1[%c0, %c0_0, %c0_1] : memref<1x4x256xf32, #tpu.memory_space<vmem>>, vector<1x4x256xf32>
    %1 = vector.shape_cast %0 : vector<1x4x256xf32> to vector<4x256xf32>
    %c0_2 = arith.constant 0 : index
    %c0_3 = arith.constant 0 : index
    %2 = vector.load %arg8[%c0_2, %c0_3] : memref<16x256xf32, #tpu.memory_space<vmem>>, vector<4x256xf32>
    tpu.vector_store %arg8[%c0_2, %c0_3], %1 {strides = array<i32>} : memref<16x256xf32, #tpu.memory_space<vmem>>, vector<4x256xf32>,
    %c0_4 = arith.constant 0 : index
    %c0_5 = arith.constant 0 : index
    %3 = vector.load %arg2[%c0_4, %c0_5] : memref<2x256xf32, #tpu.memory_space<vmem>>, vector<1x256xf32>
    %c1 = arith.constant 1 : index
    %c0_6 = arith.constant 0 : index
    %4 = vector.load %arg2[%c1, %c0_6] : memref<2x256xf32, #tpu.memory_space<vmem>>, vector<1x256xf32>
    %c0_7 = arith.constant 0 : index
    %c0_8 = arith.constant 0 : index
    %5 = vector.load %arg8[%c0_7, %c0_8] : memref<16x256xf32, #tpu.memory_space<vmem>>, vector<4x256xf32>
    %c0_9 = arith.constant 0 : index
    %c0_10 = arith.constant 0 : index
    %6 = vector.load %arg3[%c0_9, %c0_10] : memref<36x4xf32, #tpu.memory_space<vmem>>, vector<36x4xf32>
    %cst = arith.constant dense<0.000000e+00> : vector<36x256xf32>
    %7 = tpu.matmul %6, %5, %cst {dimension_numbers = #tpu.dot_dimension_numbers<[1], [0], [0], [1], [0, 0, 1, 1], [], []>} : vector<36x4xf32>, vector<4x256xf32>, vector<36x256xf32> -> vector<36x256xf32>
    %8 = vector.extract_strided_slice %7 {offsets = [0, 0], sizes = [4, 256], strides = [1, 1]} : vector<36x256xf32> to vector<4x256xf32>
    %cst_11 = arith.constant 0.000000e+00 : f32
    %9 = vector.broadcast %cst_11 : f32 to vector<4x1xf32>
    %10 = vector.extract_strided_slice %8 {offsets = [0, 0], sizes = [4, 255], strides = [1, 1]} : vector<4x256xf32> to vector<4x255xf32>
    %11 = tpu.concatenate %9, %10 in 1 : vector<4x1xf32>, vector<4x255xf32> -> vector<4x256xf32>
    %12 = vector.broadcast %3 : vector<1x256xf32> to vector<4x256xf32>
    %13 = arith.mulf %11, %12 : vector<4x256xf32>
    %14 = vector.extract_strided_slice %7 {offsets = [4, 0], sizes = [4, 256], strides = [1, 1]} : vector<36x256xf32> to vector<4x256xf32>
    %15 = arith.addf %13, %14 : vector<4x256xf32>
    %16 = vector.extract_strided_slice %7 {offsets = [8, 0], sizes = [4, 256], strides = [1, 1]} : vector<36x256xf32> to vector<4x256xf32>
    %cst_12 = arith.constant 0.000000e+00 : f32
    %17 = vector.broadcast %cst_12 : f32 to vector<4x1xf32>
    %18 = vector.extract_strided_slice %16 {offsets = [0, 1], sizes = [4, 255], strides = [1, 1]} : vector<4x256xf32> to vector<4x255xf32>
    %19 = tpu.concatenate %18, %17 in 1 : vector<4x255xf32>, vector<4x1xf32> -> vector<4x256xf32>
    %20 = vector.broadcast %4 : vector<1x256xf32> to vector<4x256xf32>
    %21 = arith.mulf %19, %20 : vector<4x256xf32>
    %22 = arith.addf %15, %21 : vector<4x256xf32>
    %cst_13 = arith.constant 0.000000e+00 : f32
    %23 = vector.broadcast %cst_13 : f32 to vector<4x16xf32>
    %24 = vector.extract_strided_slice %22 {offsets = [0, 0], sizes = [4, 240], strides = [1, 1]} : vector<4x256xf32> to vector<4x240xf32>
    %25 = tpu.concatenate %23, %24 in 1 : vector<4x16xf32>, vector<4x240xf32> -> vector<4x256xf32>
    %26 = vector.extract_strided_slice %7 {offsets = [12, 0], sizes = [4, 256], strides = [1, 1]} : vector<36x256xf32> to vector<4x256xf32>
    %cst_14 = arith.constant 0.000000e+00 : f32
    %27 = vector.broadcast %cst_14 : f32 to vector<4x1xf32>
    %28 = vector.extract_strided_slice %26 {offsets = [0, 0], sizes = [4, 255], strides = [1, 1]} : vector<4x256xf32> to vector<4x255xf32>
    %29 = tpu.concatenate %27, %28 in 1 : vector<4x1xf32>, vector<4x255xf32> -> vector<4x256xf32>
    %30 = vector.broadcast %3 : vector<1x256xf32> to vector<4x256xf32>
    %31 = arith.mulf %29, %30 : vector<4x256xf32>
    %32 = vector.extract_strided_slice %7 {offsets = [16, 0], sizes = [4, 256], strides = [1, 1]} : vector<36x256xf32> to vector<4x256xf32>
    %33 = arith.addf %31, %32 : vector<4x256xf32>
    %34 = vector.extract_strided_slice %7 {offsets = [20, 0], sizes = [4, 256], strides = [1, 1]} : vector<36x256xf32> to vector<4x256xf32>
    %cst_15 = arith.constant 0.000000e+00 : f32
    %35 = vector.broadcast %cst_15 : f32 to vector<4x1xf32>
    %36 = vector.extract_strided_slice %34 {offsets = [0, 1], sizes = [4, 255], strides = [1, 1]} : vector<4x256xf32> to vector<4x255xf32>
    %37 = tpu.concatenate %36, %35 in 1 : vector<4x255xf32>, vector<4x1xf32> -> vector<4x256xf32>
    %38 = vector.broadcast %4 : vector<1x256xf32> to vector<4x256xf32>
    %39 = arith.mulf %37, %38 : vector<4x256xf32>
    %40 = arith.addf %33, %39 : vector<4x256xf32>
    %41 = arith.addf %25, %40 : vector<4x256xf32>
    %42 = vector.extract_strided_slice %7 {offsets = [24, 0], sizes = [4, 256], strides = [1, 1]} : vector<36x256xf32> to vector<4x256xf32>
    %cst_16 = arith.constant 0.000000e+00 : f32
    %43 = vector.broadcast %cst_16 : f32 to vector<4x1xf32>
    %44 = vector.extract_strided_slice %42 {offsets = [0, 0], sizes = [4, 255], strides = [1, 1]} : vector<4x256xf32> to vector<4x255xf32>
    %45 = tpu.concatenate %43, %44 in 1 : vector<4x1xf32>, vector<4x255xf32> -> vector<4x256xf32>
    %46 = vector.broadcast %3 : vector<1x256xf32> to vector<4x256xf32>
    %47 = arith.mulf %45, %46 : vector<4x256xf32>
    %48 = vector.extract_strided_slice %7 {offsets = [28, 0], sizes = [4, 256], strides = [1, 1]} : vector<36x256xf32> to vector<4x256xf32>
    %49 = arith.addf %47, %48 : vector<4x256xf32>
    %50 = vector.extract_strided_slice %7 {offsets = [32, 0], sizes = [4, 256], strides = [1, 1]} : vector<36x256xf32> to vector<4x256xf32>
    %cst_17 = arith.constant 0.000000e+00 : f32
    %51 = vector.broadcast %cst_17 : f32 to vector<4x1xf32>
    %52 = vector.extract_strided_slice %50 {offsets = [0, 1], sizes = [4, 255], strides = [1, 1]} : vector<4x256xf32> to vector<4x255xf32>
    %53 = tpu.concatenate %52, %51 in 1 : vector<4x255xf32>, vector<4x1xf32> -> vector<4x256xf32>
    %54 = vector.broadcast %4 : vector<1x256xf32> to vector<4x256xf32>
    %55 = arith.mulf %53, %54 : vector<4x256xf32>
    %56 = arith.addf %49, %55 : vector<4x256xf32>
    %cst_18 = arith.constant 0.000000e+00 : f32
    %57 = vector.broadcast %cst_18 : f32 to vector<4x16xf32>
    %58 = vector.extract_strided_slice %56 {offsets = [0, 16], sizes = [4, 240], strides = [1, 1]} : vector<4x256xf32> to vector<4x240xf32>
    %59 = tpu.concatenate %58, %57 in 1 : vector<4x240xf32>, vector<4x16xf32> -> vector<4x256xf32>
    %60 = arith.addf %41, %59 : vector<4x256xf32>
    %cst_19 = arith.constant 0.000000e+00 : f32
    %61 = vector.broadcast %cst_19 : f32 to vector<4x256xf32>
    %62 = arith.maximumf %60, %61 : vector<4x256xf32>
    %c4 = arith.constant 4 : index
    %c0_20 = arith.constant 0 : index
    %63 = vector.load %arg8[%c4, %c0_20] : memref<16x256xf32, #tpu.memory_space<vmem>>, vector<4x256xf32>
    tpu.vector_store %arg8[%c4, %c0_20], %62 {strides = array<i32>} : memref<16x256xf32, #tpu.memory_space<vmem>>, vector<4x256xf32>,
    %c0_21 = arith.constant 0 : index
    %c0_22 = arith.constant 0 : index
    %64 = vector.load %arg8[%c0_21, %c0_22] : memref<16x256xf32, #tpu.memory_space<vmem>>, vector<8x256xf32>
    %c0_23 = arith.constant 0 : index
    %c0_24 = arith.constant 0 : index
    %65 = vector.load %arg4[%c0_23, %c0_24] : memref<36x8xf32, #tpu.memory_space<vmem>>, vector<36x8xf32>
    %cst_25 = arith.constant dense<0.000000e+00> : vector<36x256xf32>
    %66 = tpu.matmul %65, %64, %cst_25 {dimension_numbers = #tpu.dot_dimension_numbers<[1], [0], [0], [1], [0, 0, 1, 1], [], []>} : vector<36x8xf32>, vector<8x256xf32>, vector<36x256xf32> -> vector<36x256xf32>
    %67 = vector.extract_strided_slice %66 {offsets = [0, 0], sizes = [4, 256], strides = [1, 1]} : vector<36x256xf32> to vector<4x256xf32>
    %cst_26 = arith.constant 0.000000e+00 : f32
    %68 = vector.broadcast %cst_26 : f32 to vector<4x1xf32>
    %69 = vector.extract_strided_slice %67 {offsets = [0, 0], sizes = [4, 255], strides = [1, 1]} : vector<4x256xf32> to vector<4x255xf32>
    %70 = tpu.concatenate %68, %69 in 1 : vector<4x1xf32>, vector<4x255xf32> -> vector<4x256xf32>
    %71 = vector.broadcast %3 : vector<1x256xf32> to vector<4x256xf32>
    %72 = arith.mulf %70, %71 : vector<4x256xf32>
    %73 = vector.extract_strided_slice %66 {offsets = [4, 0], sizes = [4, 256], strides = [1, 1]} : vector<36x256xf32> to vector<4x256xf32>
    %74 = arith.addf %72, %73 : vector<4x256xf32>
    %75 = vector.extract_strided_slice %66 {offsets = [8, 0], sizes = [4, 256], strides = [1, 1]} : vector<36x256xf32> to vector<4x256xf32>
    %cst_27 = arith.constant 0.000000e+00 : f32
    %76 = vector.broadcast %cst_27 : f32 to vector<4x1xf32>
    %77 = vector.extract_strided_slice %75 {offsets = [0, 1], sizes = [4, 255], strides = [1, 1]} : vector<4x256xf32> to vector<4x255xf32>
    %78 = tpu.concatenate %77, %76 in 1 : vector<4x255xf32>, vector<4x1xf32> -> vector<4x256xf32>
    %79 = vector.broadcast %4 : vector<1x256xf32> to vector<4x256xf32>
    %80 = arith.mulf %78, %79 : vector<4x256xf32>
    %81 = arith.addf %74, %80 : vector<4x256xf32>
    %cst_28 = arith.constant 0.000000e+00 : f32
    %82 = vector.broadcast %cst_28 : f32 to vector<4x16xf32>
    %83 = vector.extract_strided_slice %81 {offsets = [0, 0], sizes = [4, 240], strides = [1, 1]} : vector<4x256xf32> to vector<4x240xf32>
    %84 = tpu.concatenate %82, %83 in 1 : vector<4x16xf32>, vector<4x240xf32> -> vector<4x256xf32>
    %85 = vector.extract_strided_slice %66 {offsets = [12, 0], sizes = [4, 256], strides = [1, 1]} : vector<36x256xf32> to vector<4x256xf32>
    %cst_29 = arith.constant 0.000000e+00 : f32
    %86 = vector.broadcast %cst_29 : f32 to vector<4x1xf32>
    %87 = vector.extract_strided_slice %85 {offsets = [0, 0], sizes = [4, 255], strides = [1, 1]} : vector<4x256xf32> to vector<4x255xf32>
    %88 = tpu.concatenate %86, %87 in 1 : vector<4x1xf32>, vector<4x255xf32> -> vector<4x256xf32>
    %89 = vector.broadcast %3 : vector<1x256xf32> to vector<4x256xf32>
    %90 = arith.mulf %88, %89 : vector<4x256xf32>
    %91 = vector.extract_strided_slice %66 {offsets = [16, 0], sizes = [4, 256], strides = [1, 1]} : vector<36x256xf32> to vector<4x256xf32>
    %92 = arith.addf %90, %91 : vector<4x256xf32>
    %93 = vector.extract_strided_slice %66 {offsets = [20, 0], sizes = [4, 256], strides = [1, 1]} : vector<36x256xf32> to vector<4x256xf32>
    %cst_30 = arith.constant 0.000000e+00 : f32
    %94 = vector.broadcast %cst_30 : f32 to vector<4x1xf32>
    %95 = vector.extract_strided_slice %93 {offsets = [0, 1], sizes = [4, 255], strides = [1, 1]} : vector<4x256xf32> to vector<4x255xf32>
    %96 = tpu.concatenate %95, %94 in 1 : vector<4x255xf32>, vector<4x1xf32> -> vector<4x256xf32>
    %97 = vector.broadcast %4 : vector<1x256xf32> to vector<4x256xf32>
    %98 = arith.mulf %96, %97 : vector<4x256xf32>
    %99 = arith.addf %92, %98 : vector<4x256xf32>
    %100 = arith.addf %84, %99 : vector<4x256xf32>
    %101 = vector.extract_strided_slice %66 {offsets = [24, 0], sizes = [4, 256], strides = [1, 1]} : vector<36x256xf32> to vector<4x256xf32>
    %cst_31 = arith.constant 0.000000e+00 : f32
    %102 = vector.broadcast %cst_31 : f32 to vector<4x1xf32>
    %103 = vector.extract_strided_slice %101 {offsets = [0, 0], sizes = [4, 255], strides = [1, 1]} : vector<4x256xf32> to vector<4x255xf32>
    %104 = tpu.concatenate %102, %103 in 1 : vector<4x1xf32>, vector<4x255xf32> -> vector<4x256xf32>
    %105 = vector.broadcast %3 : vector<1x256xf32> to vector<4x256xf32>
    %106 = arith.mulf %104, %105 : vector<4x256xf32>
    %107 = vector.extract_strided_slice %66 {offsets = [28, 0], sizes = [4, 256], strides = [1, 1]} : vector<36x256xf32> to vector<4x256xf32>
    %108 = arith.addf %106, %107 : vector<4x256xf32>
    %109 = vector.extract_strided_slice %66 {offsets = [32, 0], sizes = [4, 256], strides = [1, 1]} : vector<36x256xf32> to vector<4x256xf32>
    %cst_32 = arith.constant 0.000000e+00 : f32
    %110 = vector.broadcast %cst_32 : f32 to vector<4x1xf32>
    %111 = vector.extract_strided_slice %109 {offsets = [0, 1], sizes = [4, 255], strides = [1, 1]} : vector<4x256xf32> to vector<4x255xf32>
    %112 = tpu.concatenate %111, %110 in 1 : vector<4x255xf32>, vector<4x1xf32> -> vector<4x256xf32>
    %113 = vector.broadcast %4 : vector<1x256xf32> to vector<4x256xf32>
    %114 = arith.mulf %112, %113 : vector<4x256xf32>
    %115 = arith.addf %108, %114 : vector<4x256xf32>
    %cst_33 = arith.constant 0.000000e+00 : f32
    %116 = vector.broadcast %cst_33 : f32 to vector<4x16xf32>
    %117 = vector.extract_strided_slice %115 {offsets = [0, 16], sizes = [4, 240], strides = [1, 1]} : vector<4x256xf32> to vector<4x240xf32>
    %118 = tpu.concatenate %117, %116 in 1 : vector<4x240xf32>, vector<4x16xf32> -> vector<4x256xf32>
    %119 = arith.addf %100, %118 : vector<4x256xf32>
    %cst_34 = arith.constant 0.000000e+00 : f32
    %120 = vector.broadcast %cst_34 : f32 to vector<4x256xf32>
    %121 = arith.maximumf %119, %120 : vector<4x256xf32>
    %c8 = arith.constant 8 : index
    %c0_35 = arith.constant 0 : index
    %122 = vector.load %arg8[%c8, %c0_35] : memref<16x256xf32, #tpu.memory_space<vmem>>, vector<4x256xf32>
    tpu.vector_store %arg8[%c8, %c0_35], %121 {strides = array<i32>} : memref<16x256xf32, #tpu.memory_space<vmem>>, vector<4x256xf32>,
    %c0_36 = arith.constant 0 : index
    %c0_37 = arith.constant 0 : index
    %123 = vector.load %arg8[%c0_36, %c0_37] : memref<16x256xf32, #tpu.memory_space<vmem>>, vector<12x256xf32>
    %c0_38 = arith.constant 0 : index
    %c0_39 = arith.constant 0 : index
    %124 = vector.load %arg5[%c0_38, %c0_39] : memref<36x12xf32, #tpu.memory_space<vmem>>, vector<36x12xf32>
    %cst_40 = arith.constant dense<0.000000e+00> : vector<36x256xf32>
    %125 = tpu.matmul %124, %123, %cst_40 {dimension_numbers = #tpu.dot_dimension_numbers<[1], [0], [0], [1], [0, 0, 1, 1], [], []>} : vector<36x12xf32>, vector<12x256xf32>, vector<36x256xf32> -> vector<36x256xf32>
    %126 = vector.extract_strided_slice %125 {offsets = [0, 0], sizes = [4, 256], strides = [1, 1]} : vector<36x256xf32> to vector<4x256xf32>
    %cst_41 = arith.constant 0.000000e+00 : f32
    %127 = vector.broadcast %cst_41 : f32 to vector<4x1xf32>
    %128 = vector.extract_strided_slice %126 {offsets = [0, 0], sizes = [4, 255], strides = [1, 1]} : vector<4x256xf32> to vector<4x255xf32>
    %129 = tpu.concatenate %127, %128 in 1 : vector<4x1xf32>, vector<4x255xf32> -> vector<4x256xf32>
    %130 = vector.broadcast %3 : vector<1x256xf32> to vector<4x256xf32>
    %131 = arith.mulf %129, %130 : vector<4x256xf32>
    %132 = vector.extract_strided_slice %125 {offsets = [4, 0], sizes = [4, 256], strides = [1, 1]} : vector<36x256xf32> to vector<4x256xf32>
    %133 = arith.addf %131, %132 : vector<4x256xf32>
    %134 = vector.extract_strided_slice %125 {offsets = [8, 0], sizes = [4, 256], strides = [1, 1]} : vector<36x256xf32> to vector<4x256xf32>
    %cst_42 = arith.constant 0.000000e+00 : f32
    %135 = vector.broadcast %cst_42 : f32 to vector<4x1xf32>
    %136 = vector.extract_strided_slice %134 {offsets = [0, 1], sizes = [4, 255], strides = [1, 1]} : vector<4x256xf32> to vector<4x255xf32>
    %137 = tpu.concatenate %136, %135 in 1 : vector<4x255xf32>, vector<4x1xf32> -> vector<4x256xf32>
    %138 = vector.broadcast %4 : vector<1x256xf32> to vector<4x256xf32>
    %139 = arith.mulf %137, %138 : vector<4x256xf32>
    %140 = arith.addf %133, %139 : vector<4x256xf32>
    %cst_43 = arith.constant 0.000000e+00 : f32
    %141 = vector.broadcast %cst_43 : f32 to vector<4x16xf32>
    %142 = vector.extract_strided_slice %140 {offsets = [0, 0], sizes = [4, 240], strides = [1, 1]} : vector<4x256xf32> to vector<4x240xf32>
    %143 = tpu.concatenate %141, %142 in 1 : vector<4x16xf32>, vector<4x240xf32> -> vector<4x256xf32>
    %144 = vector.extract_strided_slice %125 {offsets = [12, 0], sizes = [4, 256], strides = [1, 1]} : vector<36x256xf32> to vector<4x256xf32>
    %cst_44 = arith.constant 0.000000e+00 : f32
    %145 = vector.broadcast %cst_44 : f32 to vector<4x1xf32>
    %146 = vector.extract_strided_slice %144 {offsets = [0, 0], sizes = [4, 255], strides = [1, 1]} : vector<4x256xf32> to vector<4x255xf32>
    %147 = tpu.concatenate %145, %146 in 1 : vector<4x1xf32>, vector<4x255xf32> -> vector<4x256xf32>
    %148 = vector.broadcast %3 : vector<1x256xf32> to vector<4x256xf32>
    %149 = arith.mulf %147, %148 : vector<4x256xf32>
    %150 = vector.extract_strided_slice %125 {offsets = [16, 0], sizes = [4, 256], strides = [1, 1]} : vector<36x256xf32> to vector<4x256xf32>
    %151 = arith.addf %149, %150 : vector<4x256xf32>
    %152 = vector.extract_strided_slice %125 {offsets = [20, 0], sizes = [4, 256], strides = [1, 1]} : vector<36x256xf32> to vector<4x256xf32>
    %cst_45 = arith.constant 0.000000e+00 : f32
    %153 = vector.broadcast %cst_45 : f32 to vector<4x1xf32>
    %154 = vector.extract_strided_slice %152 {offsets = [0, 1], sizes = [4, 255], strides = [1, 1]} : vector<4x256xf32> to vector<4x255xf32>
    %155 = tpu.concatenate %154, %153 in 1 : vector<4x255xf32>, vector<4x1xf32> -> vector<4x256xf32>
    %156 = vector.broadcast %4 : vector<1x256xf32> to vector<4x256xf32>
    %157 = arith.mulf %155, %156 : vector<4x256xf32>
    %158 = arith.addf %151, %157 : vector<4x256xf32>
    %159 = arith.addf %143, %158 : vector<4x256xf32>
    %160 = vector.extract_strided_slice %125 {offsets = [24, 0], sizes = [4, 256], strides = [1, 1]} : vector<36x256xf32> to vector<4x256xf32>
    %cst_46 = arith.constant 0.000000e+00 : f32
    %161 = vector.broadcast %cst_46 : f32 to vector<4x1xf32>
    %162 = vector.extract_strided_slice %160 {offsets = [0, 0], sizes = [4, 255], strides = [1, 1]} : vector<4x256xf32> to vector<4x255xf32>
    %163 = tpu.concatenate %161, %162 in 1 : vector<4x1xf32>, vector<4x255xf32> -> vector<4x256xf32>
    %164 = vector.broadcast %3 : vector<1x256xf32> to vector<4x256xf32>
    %165 = arith.mulf %163, %164 : vector<4x256xf32>
    %166 = vector.extract_strided_slice %125 {offsets = [28, 0], sizes = [4, 256], strides = [1, 1]} : vector<36x256xf32> to vector<4x256xf32>
    %167 = arith.addf %165, %166 : vector<4x256xf32>
    %168 = vector.extract_strided_slice %125 {offsets = [32, 0], sizes = [4, 256], strides = [1, 1]} : vector<36x256xf32> to vector<4x256xf32>
    %cst_47 = arith.constant 0.000000e+00 : f32
    %169 = vector.broadcast %cst_47 : f32 to vector<4x1xf32>
    %170 = vector.extract_strided_slice %168 {offsets = [0, 1], sizes = [4, 255], strides = [1, 1]} : vector<4x256xf32> to vector<4x255xf32>
    %171 = tpu.concatenate %170, %169 in 1 : vector<4x255xf32>, vector<4x1xf32> -> vector<4x256xf32>
    %172 = vector.broadcast %4 : vector<1x256xf32> to vector<4x256xf32>
    %173 = arith.mulf %171, %172 : vector<4x256xf32>
    %174 = arith.addf %167, %173 : vector<4x256xf32>
    %cst_48 = arith.constant 0.000000e+00 : f32
    %175 = vector.broadcast %cst_48 : f32 to vector<4x16xf32>
    %176 = vector.extract_strided_slice %174 {offsets = [0, 16], sizes = [4, 240], strides = [1, 1]} : vector<4x256xf32> to vector<4x240xf32>
    %177 = tpu.concatenate %176, %175 in 1 : vector<4x240xf32>, vector<4x16xf32> -> vector<4x256xf32>
    %178 = arith.addf %159, %177 : vector<4x256xf32>
    %cst_49 = arith.constant 0.000000e+00 : f32
    %179 = vector.broadcast %cst_49 : f32 to vector<4x256xf32>
    %180 = arith.maximumf %178, %179 : vector<4x256xf32>
    %c12 = arith.constant 12 : index
    %c0_50 = arith.constant 0 : index
    %181 = vector.load %arg8[%c12, %c0_50] : memref<16x256xf32, #tpu.memory_space<vmem>>, vector<4x256xf32>
    tpu.vector_store %arg8[%c12, %c0_50], %180 {strides = array<i32>} : memref<16x256xf32, #tpu.memory_space<vmem>>, vector<4x256xf32>,
    %c0_51 = arith.constant 0 : index
    %c0_52 = arith.constant 0 : index
    %182 = vector.load %arg6[%c0_51, %c0_52] : memref<4x16xf32, #tpu.memory_space<vmem>>, vector<4x16xf32>
    %c0_53 = arith.constant 0 : index
    %c0_54 = arith.constant 0 : index
    %183 = vector.load %arg8[%c0_53, %c0_54] : memref<16x256xf32, #tpu.memory_space<vmem>>, vector<16x256xf32>
    %cst_55 = arith.constant dense<0.000000e+00> : vector<4x256xf32>
    %184 = tpu.matmul %182, %183, %cst_55 {dimension_numbers = #tpu.dot_dimension_numbers<[1], [0], [0], [1], [0, 0, 1, 1], [], []>} : vector<4x16xf32>, vector<16x256xf32>, vector<4x256xf32> -> vector<4x256xf32>
    %185 = arith.addf %184, %1 : vector<4x256xf32>
    %c0_56 = arith.constant 0 : index
    %c0_57 = arith.constant 0 : index
    %c0_58 = arith.constant 0 : index
    %186 = vector.load %arg7[%c0_56, %c0_57, %c0_58] : memref<1x4x256xf32, #tpu.memory_space<vmem>>, vector<1x4x256xf32>
    %187 = vector.shape_cast %186 : vector<1x4x256xf32> to vector<4x256xf32>
    %188 = vector.shape_cast %185 : vector<4x256xf32> to vector<1x4x256xf32>
    tpu.vector_store %arg7[%c0_56, %c0_57, %c0_58], %188 {strides = array<i32>} : memref<1x4x256xf32, #tpu.memory_space<vmem>>, vector<1x4x256xf32>,
    return
  }
  func.func @transform_0(%arg0: i32) -> (i32, i32, i32) {
    %c0_i32 = arith.constant 0 : i32
    %c0_i32_0 = arith.constant 0 : i32
    %c0_i32_1 = arith.constant 0 : i32
    return %arg0, %c0_i32, %c0_i32_0 : i32, i32, i32
  }
  func.func @transform_1(%arg0: i32) -> (i32, i32) {
    %c0_i32 = arith.constant 0 : i32
    %c0_i32_0 = arith.constant 0 : i32
    %c0_i32_1 = arith.constant 0 : i32
    return %c0_i32, %c0_i32_0 : i32, i32
  }
  func.func @transform_2(%arg0: i32) -> (i32, i32) {
    %c0_i32 = arith.constant 0 : i32
    %c0_i32_0 = arith.constant 0 : i32
    %c0_i32_1 = arith.constant 0 : i32
    return %c0_i32, %c0_i32_0 : i32, i32
  }
  func.func @transform_3(%arg0: i32) -> (i32, i32) {
    %c0_i32 = arith.constant 0 : i32
    %c0_i32_0 = arith.constant 0 : i32
    %c0_i32_1 = arith.constant 0 : i32
    return %c0_i32, %c0_i32_0 : i32, i32
  }
  func.func @transform_4(%arg0: i32) -> (i32, i32) {
    %c0_i32 = arith.constant 0 : i32
    %c0_i32_0 = arith.constant 0 : i32
    %c0_i32_1 = arith.constant 0 : i32
    return %c0_i32, %c0_i32_0 : i32, i32
  }
  func.func @transform_5(%arg0: i32) -> (i32, i32) {
    %c0_i32 = arith.constant 0 : i32
    %c0_i32_0 = arith.constant 0 : i32
    %c0_i32_1 = arith.constant 0 : i32
    return %c0_i32, %c0_i32_0 : i32, i32
  }
  func.func @transform_6(%arg0: i32) -> (i32, i32, i32) {
    %c0_i32 = arith.constant 0 : i32
    %c0_i32_0 = arith.constant 0 : i32
    %c0_i32_1 = arith.constant 0 : i32
    return %arg0, %c0_i32, %c0_i32_0 : i32, i32, i32
  }
}

</mosaic_0001>

<llo_original>
// kernel: tpu_custom_call.1
$region0: #{tpu_custom_call.1}
  #allocation0 [shape = 'u32[]', space=smem, size = 0x4, offset = 0x4, fixed_abs, tag = 'smem constant byte address 0x4 - core index']
  #allocation1 [shape = 'u32[144,128]{1,0:T(1,128)}', space=vmem, size = 0x12000, scoped, tag = 'internal scratch']
  #allocation2 [shape = 'f32[16,256]{1,0:T(8,128)}', space=vmem, size = 0x4000, scoped, tag = 'scratch operand']
  %s0 = inlined_call_operand.vmem [shape: f32[2,4,256], index: 0, kind: input, shape index: {}]
  %s1 = inlined_call_operand.vmem [shape: f32[2,256], index: 1, kind: input, shape index: {}]
  %s2 = inlined_call_operand.vmem [shape: f32[36,4], index: 2, kind: input, shape index: {}]
  %s3 = inlined_call_operand.vmem [shape: f32[36,8], index: 3, kind: input, shape index: {}]
  %s4 = inlined_call_operand.vmem [shape: f32[36,12], index: 4, kind: input, shape index: {}]
  %s5 = inlined_call_operand.vmem [shape: f32[4,16], index: 5, kind: input, shape index: {}]
  %s6 = inlined_call_operand.hbm [shape: f32[2,4,256], index: 6, kind: output, shape index: {}]
  %s7 = sld [smem:[#allocation0]]
  $region57: #{tpu_custom_call.1} parent=0
    _
  %s9 = ssub.s32 1, %s7
  %s10 = scalar_select 0, %s9, %s7
  $region1: #{tpu_custom_call.1} parent=0
    #allocation3 [shape = 'u8[8192]{0}', space=vmem, size = 0x2000, scoped, tag = 'output window, operand 0']
    #allocation4 [shape = 's32[2]{0}', space=sflag, size = 0x8, scoped, tag = 'scoped memory for tpu_custom_call.1']
    %11 = vsyncpa [#allocation4], 0
    %s12 = scalar_lea.sflag [#allocation4], 1
    %13 = vsyncpa %s12, 0
    loop: start=0, step=1, limit=4
    $region2: #{tpu_custom_call.1} parent=1 // loop_pre_header
      _
    $region3: #{tpu_custom_call.1} parent=1 // loop_header
      %s15 = sphi 0, %s19
      %p16 = scmp.ge.s32.totalorder %s15, 4
      %s25 = sphi 0, %s27
      %s28 = sphi 0, %s25
      %s29 = sphi 0, %s28
      %s45 = sphi 0, %s29
      %s49 = sphi 0, %s49
      %s51 = sphi 0, %s49
      %s52 = sphi 0, %s51
      %s66 = sphi 0, %s52
      %s70 = sphi 0, %s70
      %s72 = sphi 0, %s70
      %s73 = sphi 0, %s72
      %s87 = sphi 0, %s73
      %s91 = sphi 0, %s91
      %s93 = sphi 0, %s91
      %s94 = sphi 0, %s93
      %s108 = sphi 0, %s94
      %s112 = sphi 0, %s112
      %s114 = sphi 0, %s112
      %s115 = sphi 0, %s114
      %s129 = sphi 0, %s115
      %s133 = sphi 0, %s133
      %s135 = sphi 0, %s133
      %s136 = sphi 0, %s135
      %s150 = sphi 0, %s136
      %s156 = sphi 0, %s158
      %s159 = sphi 0, %s156
      %s160 = sphi 0, %s159
      %s176 = sphi 0, %s160
    $region4: #{tpu_custom_call.1} parent=1 // loop_header_branch
      %18 = sbr.rel (%p16) target = $region8
    $region5: #{tpu_custom_call.1} parent=1 // loop_body
      %s20 = ssub.s32 %s15, 1
      %s21 = ssub.s32 %s15, 2
      %s22 = sadd.s32 %s15, 1
      %s23 = ssub.s32 %s15, %s22
      %p24 = scmp.eq.s32.totalorder %s23, 0
      %s26 = sadd.s32 %s25, 1
      %s27 = scalar_select %p24, %s25, %s26
      %p30 = pneg %p24
      %p31 = scmp.eq.s32.totalorder %s15, 1
      %p32 = por %p30, %p31
      %p33 = scmp.ne.s32.totalorder %s25, %s28
      %p34 = scmp.eq.s32.totalorder %s15, 0
      %p35 = por %p33, %p34
      %p36 = scmp.ne.s32.totalorder %s25, %s28
      %p37 = scmp.eq.s32.totalorder %s20, 1
      %p38 = por %p36, %p37
      %p39 = scmp.ne.s32.totalorder %s28, %s29
      %p40 = scmp.eq.s32.totalorder %s20, 0
      %p41 = por %p39, %p40
      %p42 = scmp.ne.s32.totalorder %s28, %s29
      %p43 = scmp.eq.s32.totalorder %s21, 1
      %p44 = por %p42, %p43
      %p46 = scmp.ne.s32.totalorder %s29, %s45
      %p47 = scmp.eq.s32.totalorder %s21, 0
      %p48 = por %p46, %p47
      %s50 = sadd.s32 %s49, 1
      %p53 = scmp.eq.s32.totalorder %s15, 1
      %p54 = scmp.ne.s32.totalorder %s49, %s51
      %p55 = scmp.eq.s32.totalorder %s15, 0
      %p56 = por %p54, %p55
      %p57 = scmp.ne.s32.totalorder %s49, %s51
      %p58 = scmp.eq.s32.totalorder %s20, 1
      %p59 = por %p57, %p58
      %p60 = scmp.ne.s32.totalorder %s51, %s52
      %p61 = scmp.eq.s32.totalorder %s20, 0
      %p62 = por %p60, %p61
      %p63 = scmp.ne.s32.totalorder %s51, %s52
      %p64 = scmp.eq.s32.totalorder %s21, 1
      %p65 = por %p63, %p64
      %p67 = scmp.ne.s32.totalorder %s52, %s66
      %p68 = scmp.eq.s32.totalorder %s21, 0
      %p69 = por %p67, %p68
      %s71 = sadd.s32 %s70, 1
      %p74 = scmp.eq.s32.totalorder %s15, 1
      %p75 = scmp.ne.s32.totalorder %s70, %s72
      %p76 = scmp.eq.s32.totalorder %s15, 0
      %p77 = por %p75, %p76
      %p78 = scmp.ne.s32.totalorder %s70, %s72
      %p79 = scmp.eq.s32.totalorder %s20, 1
      %p80 = por %p78, %p79
      %p81 = scmp.ne.s32.totalorder %s72, %s73
      %p82 = scmp.eq.s32.totalorder %s20, 0
      %p83 = por %p81, %p82
      %p84 = scmp.ne.s32.totalorder %s72, %s73
      %p85 = scmp.eq.s32.totalorder %s21, 1
      %p86 = por %p84, %p85
      %p88 = scmp.ne.s32.totalorder %s73, %s87
      %p89 = scmp.eq.s32.totalorder %s21, 0
      %p90 = por %p88, %p89
      %s92 = sadd.s32 %s91, 1
      %p95 = scmp.eq.s32.totalorder %s15, 1
      %p96 = scmp.ne.s32.totalorder %s91, %s93
      %p97 = scmp.eq.s32.totalorder %s15, 0
      %p98 = por %p96, %p97
      %p99 = scmp.ne.s32.totalorder %s91, %s93
      %p100 = scmp.eq.s32.totalorder %s20, 1
      %p101 = por %p99, %p100
      %p102 = scmp.ne.s32.totalorder %s93, %s94
      %p103 = scmp.eq.s32.totalorder %s20, 0
      %p104 = por %p102, %p103
      %p105 = scmp.ne.s32.totalorder %s93, %s94
      %p106 = scmp.eq.s32.totalorder %s21, 1
      %p107 = por %p105, %p106
      %p109 = scmp.ne.s32.totalorder %s94, %s108
      %p110 = scmp.eq.s32.totalorder %s21, 0
      %p111 = por %p109, %p110
      %s113 = sadd.s32 %s112, 1
      %p116 = scmp.eq.s32.totalorder %s15, 1
      %p117 = scmp.ne.s32.totalorder %s112, %s114
      %p118 = scmp.eq.s32.totalorder %s15, 0
      %p119 = por %p117, %p118
      %p120 = scmp.ne.s32.totalorder %s112, %s114
      %p121 = scmp.eq.s32.totalorder %s20, 1
      %p122 = por %p120, %p121
      %p123 = scmp.ne.s32.totalorder %s114, %s115
      %p124 = scmp.eq.s32.totalorder %s20, 0
      %p125 = por %p123, %p124
      %p126 = scmp.ne.s32.totalorder %s114, %s115
      %p127 = scmp.eq.s32.totalorder %s21, 1
      %p128 = por %p126, %p127
      %p130 = scmp.ne.s32.totalorder %s115, %s129
      %p131 = scmp.eq.s32.totalorder %s21, 0
      %p132 = por %p130, %p131
      %s134 = sadd.s32 %s133, 1
      %p137 = scmp.eq.s32.totalorder %s15, 1
      %p138 = scmp.ne.s32.totalorder %s133, %s135
      %p139 = scmp.eq.s32.totalorder %s15, 0
      %p140 = por %p138, %p139
      %p141 = scmp.ne.s32.totalorder %s133, %s135
      %p142 = scmp.eq.s32.totalorder %s20, 1
      %p143 = por %p141, %p142
      %p144 = scmp.ne.s32.totalorder %s135, %s136
      %p145 = scmp.eq.s32.totalorder %s20, 0
      %p146 = por %p144, %p145
      %p147 = scmp.ne.s32.totalorder %s135, %s136
      %p148 = scmp.eq.s32.totalorder %s21, 1
      %p149 = por %p147, %p148
      %p151 = scmp.ne.s32.totalorder %s136, %s150
      %p152 = scmp.eq.s32.totalorder %s21, 0
      %p153 = por %p151, %p152
      %s154 = ssub.s32 %s15, %s22
      %p155 = scmp.eq.s32.totalorder %s154, 0
      %s157 = sadd.s32 %s156, 1
      %s158 = scalar_select %p155, %s156, %s157
      %p161 = pneg %p155
      %p162 = scmp.eq.s32.totalorder %s15, 1
      %p163 = por %p161, %p162
      %p164 = scmp.ne.s32.totalorder %s156, %s159
      %p165 = scmp.eq.s32.totalorder %s15, 0
      %p166 = por %p164, %p165
      %p167 = scmp.ne.s32.totalorder %s156, %s159
      %p168 = scmp.eq.s32.totalorder %s20, 1
      %p169 = por %p167, %p168
      %p170 = scmp.ne.s32.totalorder %s159, %s160
      %p171 = scmp.eq.s32.totalorder %s20, 0
      %p172 = por %p170, %p171
      %p173 = scmp.ne.s32.totalorder %s159, %s160
      %p174 = scmp.eq.s32.totalorder %s21, 1
      %p175 = por %p173, %p174
      %p177 = scmp.ne.s32.totalorder %s160, %s176
      %p178 = scmp.eq.s32.totalorder %s21, 0
      %p179 = por %p177, %p178
      %p180 = scmp.le.s32.totalorder 1, %s15
      %p181 = scmp.lt.s32.totalorder %s15, 3
      %p182 = pnand %p180, %p181
      %p183 = pneg %p182
      // Predicated region
      $region9: #{tpu_custom_call.1} parent=5 // pred_check
        _
      $region10: #{tpu_custom_call.1} parent=5 // pred_check_branch
        %185 = sbr.rel (%p182) target = $region12
      $region11: #{tpu_custom_call.1} parent=5 // pred_region
        %s186 = ssub.s32 %s15, 1
        // Predicated region
        $region13: #{tpu_custom_call.1} parent=11 // pred_check
          %p187 = pneg %p62
        $region14: #{tpu_custom_call.1} parent=11 // pred_check_branch
          %189 = sbr.rel (%p187) target = $region16
        $region15: #{tpu_custom_call.1} parent=11 // pred_region
          _
        $region16: #{tpu_custom_call.1} parent=11 // pred_fallthru
          _
        // Predicated region
        $region17: #{tpu_custom_call.1} parent=11 // pred_check
          %p190 = pneg %p83
        $region18: #{tpu_custom_call.1} parent=11 // pred_check_branch
          %192 = sbr.rel (%p190) target = $region20
        $region19: #{tpu_custom_call.1} parent=11 // pred_region
          _
        $region20: #{tpu_custom_call.1} parent=11 // pred_fallthru
          _
        // Predicated region
        $region21: #{tpu_custom_call.1} parent=11 // pred_check
          %p193 = pneg %p104
        $region22: #{tpu_custom_call.1} parent=11 // pred_check_branch
          %195 = sbr.rel (%p193) target = $region24
        $region23: #{tpu_custom_call.1} parent=11 // pred_region
          _
        $region24: #{tpu_custom_call.1} parent=11 // pred_fallthru
          _
        // Predicated region
        $region25: #{tpu_custom_call.1} parent=11 // pred_check
          %p196 = pneg %p125
        $region26: #{tpu_custom_call.1} parent=11 // pred_check_branch
          %198 = sbr.rel (%p196) target = $region28
        $region27: #{tpu_custom_call.1} parent=11 // pred_region
          _
        $region28: #{tpu_custom_call.1} parent=11 // pred_fallthru
          _
        // Predicated region
        $region29: #{tpu_custom_call.1} parent=11 // pred_check
          %p199 = pneg %p146
        $region30: #{tpu_custom_call.1} parent=11 // pred_check_branch
          %201 = sbr.rel (%p199) target = $region32
        $region31: #{tpu_custom_call.1} parent=11 // pred_region
          _
        $region32: #{tpu_custom_call.1} parent=11 // pred_fallthru
          _
      $region12: #{tpu_custom_call.1} parent=5 // pred_fallthru
        _
      %p202 = scmp.lt.s32.totalorder %s15, 2
      // Predicated region
      $region33: #{tpu_custom_call.1} parent=5 // pred_check
        %p203 = pneg %p202
      $region34: #{tpu_custom_call.1} parent=5 // pred_check_branch
        %205 = sbr.rel (%p203) target = $region36
      $region35: #{tpu_custom_call.1} parent=5 // pred_region
        // Predicated region
        $region37: #{tpu_custom_call.1} parent=35 // pred_check
          %p206 = pneg %p35
        $region38: #{tpu_custom_call.1} parent=35 // pred_check_branch
          %208 = sbr.rel (%p206) target = $region40
        $region39: #{tpu_custom_call.1} parent=35 // pred_region
          %p209 = scmp.lt.s32.totalorder %s15, 1
          %s210 = scalar_select %p209, %s15, 1
          %s211 = smul.addr %s210, 2
          %s212 = smul.addr %s211, 4
          %s213 = scalar_lea.vmem %s0, %s212
        $region40: #{tpu_custom_call.1} parent=35 // pred_fallthru
          _
      $region36: #{tpu_custom_call.1} parent=5 // pred_fallthru
        _
      %p214 = scmp.le.s32.totalorder 1, %s15
      %p215 = scmp.lt.s32.totalorder %s15, 3
      %p216 = pnand %p214, %p215
      %p217 = pneg %p216
      // Predicated region
      $region41: #{tpu_custom_call.1} parent=5 // pred_check
        _
      $region42: #{tpu_custom_call.1} parent=5 // pred_check_branch
        %219 = sbr.rel (%p216) target = $region44
      $region43: #{tpu_custom_call.1} parent=5 // pred_region
        %s220 = ssub.s32 %s15, 1
        %p221 = scmp.lt.s32.totalorder %s20, 1
        %s222 = scalar_select %p221, %s20, 1
        %s223 = smul.addr %s222, 2
        %s224 = smul.addr %s223, 4
        %s225 = scalar_lea.vmem %s0, %s224
        %p226 = pneg %p41
        %p227 = pneg %p38
        %p228 = pneg %p62
        %p229 = pneg %p59
        %p230 = pneg %p83
        %p231 = pneg %p80
        %p232 = pneg %p104
        %p233 = pneg %p101
        %p234 = pneg %p125
        %p235 = pneg %p122
        %p236 = pneg %p146
        %p237 = pneg %p143
        %p238 = pneg %p172
        %p239 = pneg %p169
        %s240 = sand.u32 %s159, 1
        %s241 = scalar_lea.sflag [#allocation4], %s240
        %s242 = sand.u32 %s159, 1
        %s243 = smul.addr %s242, 8
        %s244 = scalar_lea.vmem [#allocation3], %s243
        %p245 = scmp.lt.s32.totalorder %s20, 1
        %s246 = scalar_select %p245, %s20, 1
        %s247 = smul.addr %s246, 2
        %s248 = smul.addr %s247, 4
        %s249 = scalar_lea.vmem %s0, %s248
        %v250 = vld [vmem:[%s249] sm:$0xff]
        %v252 = vcombine.high %v250, %v250
        %254 = vst [vmem:[#allocation2] sm:$0xf] %v250
        %255 = vst [vmem:[#allocation2 + $0x8] sm:$0xf] %v252
        %v256 = vld [vmem:[%s1] ss:$2 sm:$0x3]
        %s257 = scalar_lea.vmem %s1, 1
        %v258 = vld [vmem:[%s257] ss:$2 sm:$0x3]
        %v259 = vld [vmem:[#allocation2] sm:$0xf]
        %v260 = vld [vmem:[#allocation2 + $0x8] sm:$0xf]
        %v261 = vld [vmem:[%s2] sm:$0xff]
        %v262 = vld [vmem:[%s2 + $0x8] sm:$0xff]
        %v263 = vld [vmem:[%s2 + $0x10] sm:$0xff]
        %v264 = vld [vmem:[%s2 + $0x18] sm:$0xff]
        %v265 = vld [vmem:[%s2 + $0x20] sm:$0xf]
        %vm266 = vcmask 31744
        %v268 = vsel %vm266, %v261, 0
        %v271 = vsel %vm266, %v262, 0
        %v274 = vsel %vm266, %v263, 0
        %v277 = vsel %vm266, %v264, 0
        %v280 = vsel %vm266, %v265, 0
        %vm282 = vcmask 1043456
        %v284 = vsel %vm282, %v259, 0
        %v287 = vsel %vm282, %v260, 0
        %289 = vmatprep.subr.mxu0 %v287
        %290 = vmatpush1.msra.mxu0 %v284
        %291 = vmatprep.subr.mxu0 0.0
        %292 = vmatpush1.msra.mxu0 0.0
        %293 = vmatprep.subr.mxu0 0.0
        %294 = vmatpush1.msra.mxu0 0.0
        %295 = vmatprep.subr.mxu0 0.0
        %296 = vmatpush1.msra.mxu0 0.0
        %297 = vmatprep.subr.mxu0 0.0
        %298 = vmatpush1.msra.mxu0 0.0
        %299 = vmatprep.subr.mxu0 0.0
        %300 = vmatpush1.msra.mxu0 0.0
        %301 = vmatprep.subr.mxu0 0.0
        %302 = vmatpush1.msra.mxu0 0.0
        %303 = vmatprep.subr.mxu0 0.0
        %304 = vmatpush1.msra.mxu0 0.0
        %305 = vmatprep.subr.mxu0 0.0
        %306 = vmatpush1.msra.mxu0 0.0
        %307 = vmatprep.subr.mxu0 0.0
        %308 = vmatpush1.msra.mxu0 0.0
        %309 = vmatprep.subr.mxu0 0.0
        %310 = vmatpush1.msra.mxu0 0.0
        %311 = vmatprep.subr.mxu0 0.0
        %312 = vmatpush1.msra.mxu0 0.0
        %313 = vmatprep.subr.mxu0 0.0
        %314 = vmatpush1.msra.mxu0 0.0
        %315 = vmatprep.subr.mxu0 0.0
        %316 = vmatpush1.msra.mxu0 0.0
        %317 = vmatprep.subr.mxu0 0.0
        %318 = vmatpush1.msra.mxu0 0.0
        %319 = vmatprep.subr.mxu0 0.0
        %320 = vmatpush1.msra.mxu0 0.0
        %321 = vmatprep.subr.mxu0 0.0
        %322 = vmatpush1.msra.mxu0 0.0
        %323 = vmatprep.subr.mxu0 0.0
        %324 = vmatpush1.msra.mxu0 0.0
        %325 = vmatprep.subr.mxu0 0.0
        %326 = vmatpush1.msra.mxu0 0.0
        %327 = vmatprep.subr.mxu0 0.0
        %328 = vmatpush1.msra.mxu0 0.0
        %329 = vmatprep.subr.mxu0 0.0
        %330 = vmatpush1.msra.mxu0 0.0
        %331 = vmatprep.subr.mxu0 0.0
        %332 = vmatpush1.msra.mxu0 0.0
        %333 = vmatprep.subr.mxu0 0.0
        %334 = vmatpush1.msra.mxu0 0.0
        %335 = vmatprep.subr.mxu0 0.0
        %336 = vmatpush1.msra.mxu0 0.0
        %337 = vmatprep.subr.mxu0 0.0
        %338 = vmatpush1.msra.mxu0 0.0
        %339 = vmatprep.subr.mxu0 0.0
        %340 = vmatpush1.msra.mxu0 0.0
        %341 = vmatprep.subr.mxu0 0.0
        %342 = vmatpush1.msra.mxu0 0.0
        %343 = vmatprep.subr.mxu0 0.0
        %344 = vmatpush1.msra.mxu0 0.0
        %345 = vmatprep.subr.mxu0 0.0
        %346 = vmatpush1.msra.mxu0 0.0
        %347 = vmatprep.subr.mxu0 0.0
        %348 = vmatpush1.msra.mxu0 0.0
        %349 = vmatprep.subr.mxu0 0.0
        %350 = vmatpush1.msra.mxu0 0.0
        %351 = vmatprep.subr.mxu0 0.0
        %352 = vmatpush1.msra.mxu0 0.0
        %353 = vmatprep.mubr.f32.mxu0 0.0
        %354 = vmatmul.mubr.f32.gmra.mrb[0].mxu0 %v268
        %v355 = vpop.f32.mrb[0].mxu0
        %v356 = vadd.f32 0.0, %v355
        %v357 = vpop.f32.mrb[0].mxu0
        %v358 = vadd.f32 0.0, %v357
        %359 = vmatprep.mubr.f32.mxu0 0.0
        %360 = vmatmul.mubr.f32.gmra.mrb[0].mxu0 %v271
        %v361 = vpop.f32.mrb[0].mxu0
        %v362 = vadd.f32 0.0, %v361
        %v363 = vpop.f32.mrb[0].mxu0
        %v364 = vadd.f32 0.0, %v363
        %365 = vmatprep.mubr.f32.mxu0 0.0
        %366 = vmatmul.mubr.f32.gmra.mrb[0].mxu0 %v274
        %v367 = vpop.f32.mrb[0].mxu0
        %v368 = vadd.f32 0.0, %v367
        %v369 = vpop.f32.mrb[0].mxu0
        %v370 = vadd.f32 0.0, %v369
        %371 = vmatprep.mubr.f32.mxu0 0.0
        %372 = vmatmul.mubr.f32.gmra.mrb[0].mxu0 %v277
        %v373 = vpop.f32.mrb[0].mxu0
        %v374 = vadd.f32 0.0, %v373
        %v375 = vpop.f32.mrb[0].mxu0
        %v376 = vadd.f32 0.0, %v375
        %377 = vmatprep.mubr.f32.mxu0 0.0
        %378 = vmatmul.mubr.f32.gmra.mrb[0].mxu0 %v280
        %v379 = vpop.f32.mrb[0].mxu0
        %v380 = vadd.f32 0.0, %v379
        %v381 = vpop.f32.mrb[0].mxu0
        %v382 = vadd.f32 0.0, %v381
        %383 = vdwg.mxu0
        %386 = vrot.lane.b32.xlu0 %v356, 1
        %v387 = vpop.permute.xlu0 %386
        %388 = vrot.lane.b32.xlu0 %v358, 1
        %v389 = vpop.permute.xlu0 %388
        %vm390 = vcmask 7168
        %v391 = vsel %vm390, %v387, %v389
        %v394 = vsel %vm390, 0.0, %v387
        %v396 = vlaneseq
        %v397 = vshrl.u32 %v396, 7
        %v398 = vsub.s32 0, %v397
        %v399 = vrot.slane %v256, %v398
        %v400 = vlaneseq
        %v401 = vshrl.u32 %v400, 7
        %v402 = vsub.s32 1, %v401
        %v403 = vrot.slane %v256, %v402
        %v406 = vmul.f32 %v394, %v399
        %v407 = vmul.f32 %v391, %v403
        %v408 = vrot.slane %v356, 4
        %v409 = vrot.slane %v358, 4
        %v412 = vadd.f32 %v406, %v408
        %v413 = vadd.f32 %v407, %v409
        %416 = vrot.lane.b32.xlu0 %v362, 127
        %v417 = vpop.permute.xlu0 %416
        %418 = vrot.lane.b32.xlu0 %v364, 127
        %v419 = vpop.permute.xlu0 %418
        %vm420 = vcmask 1039360
        %v421 = vsel %vm420, %v417, %v419
        %v424 = vsel %vm420, %v419, 0.0
        %v426 = vlaneseq
        %v427 = vshrl.u32 %v426, 7
        %v428 = vsub.s32 0, %v427
        %v429 = vrot.slane %v258, %v428
        %v430 = vlaneseq
        %v431 = vshrl.u32 %v430, 7
        %v432 = vsub.s32 1, %v431
        %v433 = vrot.slane %v258, %v432
        %v436 = vmul.f32 %v421, %v429
        %v437 = vmul.f32 %v424, %v433
        %v438 = vadd.f32 %v412, %v436
        %v439 = vadd.f32 %v413, %v437
        %442 = vrot.lane.b32.xlu0 %v438, 16
        %v443 = vpop.permute.xlu0 %442
        %444 = vrot.lane.b32.xlu0 %v439, 16
        %v445 = vpop.permute.xlu0 %444
        %vm446 = vcmask 130048
        %v447 = vsel %vm446, %v443, %v445
        %v450 = vsel %vm446, 0.0, %v443
        %v451 = vrot.slane %v362, 4
        %v452 = vrot.slane %v364, 4
        %453 = vrot.lane.b32.xlu0 %v451, 1
        %v454 = vpop.permute.xlu0 %453
        %455 = vrot.lane.b32.xlu0 %v452, 1
        %v456 = vpop.permute.xlu0 %455
        %v457 = vsel %vm390, %v454, %v456
        %v460 = vsel %vm390, 0.0, %v454
        %v461 = vmul.f32 %v460, %v399
        %v462 = vmul.f32 %v457, %v403
        %v463 = vadd.f32 %v461, %v368
        %v464 = vadd.f32 %v462, %v370
        %467 = vrot.lane.b32.xlu0 %v368, 127
        %v468 = vpop.permute.xlu0 %467
        %469 = vrot.lane.b32.xlu0 %v370, 127
        %v470 = vpop.permute.xlu0 %469
        %v471 = vsel %vm420, %v468, %v470
        %v474 = vsel %vm420, %v470, 0.0
        %v475 = vmul.f32 %v471, %v429
        %v476 = vmul.f32 %v474, %v433
        %v479 = vrot.slane %v475, 4
        %v480 = vrot.slane %v476, 4
        %v483 = vadd.f32 %v463, %v479
        %v484 = vadd.f32 %v464, %v480
        %v485 = vadd.f32 %v450, %v483
        %v486 = vadd.f32 %v447, %v484
        %489 = vrot.lane.b32.xlu0 %v374, 1
        %v490 = vpop.permute.xlu0 %489
        %491 = vrot.lane.b32.xlu0 %v376, 1
        %v492 = vpop.permute.xlu0 %491
        %v493 = vsel %vm390, %v490, %v492
        %v496 = vsel %vm390, 0.0, %v490
        %v497 = vmul.f32 %v496, %v399
        %v498 = vmul.f32 %v493, %v403
        %v499 = vrot.slane %v374, 4
        %v500 = vrot.slane %v376, 4
        %v503 = vadd.f32 %v497, %v499
        %v504 = vadd.f32 %v498, %v500
        %507 = vrot.lane.b32.xlu0 %v380, 127
        %v508 = vpop.permute.xlu0 %507
        %509 = vrot.lane.b32.xlu0 %v382, 127
        %v510 = vpop.permute.xlu0 %509
        %v511 = vsel %vm420, %v508, %v510
        %v514 = vsel %vm420, %v510, 0.0
        %v515 = vmul.f32 %v511, %v429
        %v516 = vmul.f32 %v514, %v433
        %v517 = vadd.f32 %v503, %v515
        %v518 = vadd.f32 %v504, %v516
        %521 = vrot.lane.b32.xlu0 %v517, 112
        %v522 = vpop.permute.xlu0 %521
        %523 = vrot.lane.b32.xlu0 %v518, 112
        %v524 = vpop.permute.xlu0 %523
        %vm525 = vcmask 916480
        %v526 = vsel %vm525, %v522, %v524
        %v529 = vsel %vm525, %v524, 0.0
        %v530 = vadd.f32 %v485, %v526
        %v531 = vadd.f32 %v486, %v529
        %v532 = vmax.f32 %v530, 0.0
        %v533 = vmax.f32 %v531, 0.0
        %v536 = vrot.slane %v532, 4
        %v537 = vrot.slane %v533, 4
        %540 = vst [vmem:[#allocation2] sm:$0xf0] %v536
        %541 = vst [vmem:[#allocation2 + $0x8] sm:$0xf0] %v537
        %v542 = vld [vmem:[#allocation2] sm:$0xff]
        %v543 = vld [vmem:[#allocation2 + $0x8] sm:$0xff]
        %v544 = vld [vmem:[%s3] sm:$0xff]
        %v545 = vld [vmem:[%s3 + $0x8] sm:$0xff]
        %v546 = vld [vmem:[%s3 + $0x10] sm:$0xff]
        %v547 = vld [vmem:[%s3 + $0x18] sm:$0xff]
        %v548 = vld [vmem:[%s3 + $0x20] sm:$0xf]
        %vm549 = vcmask 64512
        %v551 = vsel %vm549, %v544, 0
        %v554 = vsel %vm549, %v545, 0
        %v557 = vsel %vm549, %v546, 0
        %v560 = vsel %vm549, %v547, 0
        %v563 = vsel %vm549, %v548, 0
        %565 = vmatprep.subr.mxu0 %v543
        %566 = vmatpush1.msra.mxu0 %v542
        %567 = vmatprep.subr.mxu0 0.0
        %568 = vmatpush1.msra.mxu0 0.0
        %569 = vmatprep.subr.mxu0 0.0
        %570 = vmatpush1.msra.mxu0 0.0
        %571 = vmatprep.subr.mxu0 0.0
        %572 = vmatpush1.msra.mxu0 0.0
        %573 = vmatprep.subr.mxu0 0.0
        %574 = vmatpush1.msra.mxu0 0.0
        %575 = vmatprep.subr.mxu0 0.0
        %576 = vmatpush1.msra.mxu0 0.0
        %577 = vmatprep.subr.mxu0 0.0
        %578 = vmatpush1.msra.mxu0 0.0
        %579 = vmatprep.subr.mxu0 0.0
        %580 = vmatpush1.msra.mxu0 0.0
        %581 = vmatprep.subr.mxu0 0.0
        %582 = vmatpush1.msra.mxu0 0.0
        %583 = vmatprep.subr.mxu0 0.0
        %584 = vmatpush1.msra.mxu0 0.0
        %585 = vmatprep.subr.mxu0 0.0
        %586 = vmatpush1.msra.mxu0 0.0
        %587 = vmatprep.subr.mxu0 0.0
        %588 = vmatpush1.msra.mxu0 0.0
        %589 = vmatprep.subr.mxu0 0.0
        %590 = vmatpush1.msra.mxu0 0.0
        %591 = vmatprep.subr.mxu0 0.0
        %592 = vmatpush1.msra.mxu0 0.0
        %593 = vmatprep.subr.mxu0 0.0
        %594 = vmatpush1.msra.mxu0 0.0
        %595 = vmatprep.subr.mxu0 0.0
        %596 = vmatpush1.msra.mxu0 0.0
        %597 = vmatprep.subr.mxu0 0.0
        %598 = vmatpush1.msra.mxu0 0.0
        %599 = vmatprep.subr.mxu0 0.0
        %600 = vmatpush1.msra.mxu0 0.0
        %601 = vmatprep.subr.mxu0 0.0
        %602 = vmatpush1.msra.mxu0 0.0
        %603 = vmatprep.subr.mxu0 0.0
        %604 = vmatpush1.msra.mxu0 0.0
        %605 = vmatprep.subr.mxu0 0.0
        %606 = vmatpush1.msra.mxu0 0.0
        %607 = vmatprep.subr.mxu0 0.0
        %608 = vmatpush1.msra.mxu0 0.0
        %609 = vmatprep.subr.mxu0 0.0
        %610 = vmatpush1.msra.mxu0 0.0
        %611 = vmatprep.subr.mxu0 0.0
        %612 = vmatpush1.msra.mxu0 0.0
        %613 = vmatprep.subr.mxu0 0.0
        %614 = vmatpush1.msra.mxu0 0.0
        %615 = vmatprep.subr.mxu0 0.0
        %616 = vmatpush1.msra.mxu0 0.0
        %617 = vmatprep.subr.mxu0 0.0
        %618 = vmatpush1.msra.mxu0 0.0
        %619 = vmatprep.subr.mxu0 0.0
        %620 = vmatpush1.msra.mxu0 0.0
        %621 = vmatprep.subr.mxu0 0.0
        %622 = vmatpush1.msra.mxu0 0.0
        %623 = vmatprep.subr.mxu0 0.0
        %624 = vmatpush1.msra.mxu0 0.0
        %625 = vmatprep.subr.mxu0 0.0
        %626 = vmatpush1.msra.mxu0 0.0
        %627 = vmatprep.subr.mxu0 0.0
        %628 = vmatpush1.msra.mxu0 0.0
        %629 = vmatprep.mubr.f32.mxu0 0.0
        %630 = vmatmul.mubr.f32.gmra.mrb[0].mxu0 %v551
        %v631 = vpop.f32.mrb[0].mxu0
        %v632 = vadd.f32 0.0, %v631
        %v633 = vpop.f32.mrb[0].mxu0
        %v634 = vadd.f32 0.0, %v633
        %635 = vmatprep.mubr.f32.mxu0 0.0
        %636 = vmatmul.mubr.f32.gmra.mrb[0].mxu0 %v554
        %v637 = vpop.f32.mrb[0].mxu0
        %v638 = vadd.f32 0.0, %v637
        %v639 = vpop.f32.mrb[0].mxu0
        %v640 = vadd.f32 0.0, %v639
        %641 = vmatprep.mubr.f32.mxu0 0.0
        %642 = vmatmul.mubr.f32.gmra.mrb[0].mxu0 %v557
        %v643 = vpop.f32.mrb[0].mxu0
        %v644 = vadd.f32 0.0, %v643
        %v645 = vpop.f32.mrb[0].mxu0
        %v646 = vadd.f32 0.0, %v645
        %647 = vmatprep.mubr.f32.mxu0 0.0
        %648 = vmatmul.mubr.f32.gmra.mrb[0].mxu0 %v560
        %v649 = vpop.f32.mrb[0].mxu0
        %v650 = vadd.f32 0.0, %v649
        %v651 = vpop.f32.mrb[0].mxu0
        %v652 = vadd.f32 0.0, %v651
        %653 = vmatprep.mubr.f32.mxu0 0.0
        %654 = vmatmul.mubr.f32.gmra.mrb[0].mxu0 %v563
        %v655 = vpop.f32.mrb[0].mxu0
        %v656 = vadd.f32 0.0, %v655
        %v657 = vpop.f32.mrb[0].mxu0
        %v658 = vadd.f32 0.0, %v657
        %659 = vdwg.mxu0
        %662 = vrot.lane.b32.xlu0 %v632, 1
        %v663 = vpop.permute.xlu0 %662
        %664 = vrot.lane.b32.xlu0 %v634, 1
        %v665 = vpop.permute.xlu0 %664
        %v666 = vsel %vm390, %v663, %v665
        %v669 = vsel %vm390, 0.0, %v663
        %v670 = vmul.f32 %v669, %v399
        %v671 = vmul.f32 %v666, %v403
        %v672 = vrot.slane %v632, 4
        %v673 = vrot.slane %v634, 4
        %v676 = vadd.f32 %v670, %v672
        %v677 = vadd.f32 %v671, %v673
        %680 = vrot.lane.b32.xlu0 %v638, 127
        %v681 = vpop.permute.xlu0 %680
        %682 = vrot.lane.b32.xlu0 %v640, 127
        %v683 = vpop.permute.xlu0 %682
        %v684 = vsel %vm420, %v681, %v683
        %v687 = vsel %vm420, %v683, 0.0
        %v688 = vmul.f32 %v684, %v429
        %v689 = vmul.f32 %v687, %v433
        %v690 = vadd.f32 %v676, %v688
        %v691 = vadd.f32 %v677, %v689
        %694 = vrot.lane.b32.xlu0 %v690, 16
        %v695 = vpop.permute.xlu0 %694
        %696 = vrot.lane.b32.xlu0 %v691, 16
        %v697 = vpop.permute.xlu0 %696
        %v698 = vsel %vm446, %v695, %v697
        %v701 = vsel %vm446, 0.0, %v695
        %v702 = vrot.slane %v638, 4
        %v703 = vrot.slane %v640, 4
        %704 = vrot.lane.b32.xlu0 %v702, 1
        %v705 = vpop.permute.xlu0 %704
        %706 = vrot.lane.b32.xlu0 %v703, 1
        %v707 = vpop.permute.xlu0 %706
        %v708 = vsel %vm390, %v705, %v707
        %v711 = vsel %vm390, 0.0, %v705
        %v712 = vmul.f32 %v711, %v399
        %v713 = vmul.f32 %v708, %v403
        %v714 = vadd.f32 %v712, %v644
        %v715 = vadd.f32 %v713, %v646
        %718 = vrot.lane.b32.xlu0 %v644, 127
        %v719 = vpop.permute.xlu0 %718
        %720 = vrot.lane.b32.xlu0 %v646, 127
        %v721 = vpop.permute.xlu0 %720
        %v722 = vsel %vm420, %v719, %v721
        %v725 = vsel %vm420, %v721, 0.0
        %v726 = vmul.f32 %v722, %v429
        %v727 = vmul.f32 %v725, %v433
        %v730 = vrot.slane %v726, 4
        %v731 = vrot.slane %v727, 4
        %v734 = vadd.f32 %v714, %v730
        %v735 = vadd.f32 %v715, %v731
        %v736 = vadd.f32 %v701, %v734
        %v737 = vadd.f32 %v698, %v735
        %740 = vrot.lane.b32.xlu0 %v650, 1
        %v741 = vpop.permute.xlu0 %740
        %742 = vrot.lane.b32.xlu0 %v652, 1
        %v743 = vpop.permute.xlu0 %742
        %v744 = vsel %vm390, %v741, %v743
        %v747 = vsel %vm390, 0.0, %v741
        %v748 = vmul.f32 %v747, %v399
        %v749 = vmul.f32 %v744, %v403
        %v750 = vrot.slane %v650, 4
        %v751 = vrot.slane %v652, 4
        %v754 = vadd.f32 %v748, %v750
        %v755 = vadd.f32 %v749, %v751
        %758 = vrot.lane.b32.xlu0 %v656, 127
        %v759 = vpop.permute.xlu0 %758
        %760 = vrot.lane.b32.xlu0 %v658, 127
        %v761 = vpop.permute.xlu0 %760
        %v762 = vsel %vm420, %v759, %v761
        %v765 = vsel %vm420, %v761, 0.0
        %v766 = vmul.f32 %v762, %v429
        %v767 = vmul.f32 %v765, %v433
        %v768 = vadd.f32 %v754, %v766
        %v769 = vadd.f32 %v755, %v767
        %772 = vrot.lane.b32.xlu0 %v768, 112
        %v773 = vpop.permute.xlu0 %772
        %774 = vrot.lane.b32.xlu0 %v769, 112
        %v775 = vpop.permute.xlu0 %774
        %v776 = vsel %vm525, %v773, %v775
        %v779 = vsel %vm525, %v775, 0.0
        %v780 = vadd.f32 %v736, %v776
        %v781 = vadd.f32 %v737, %v779
        %v782 = vmax.f32 %v780, 0.0
        %v783 = vmax.f32 %v781, 0.0
        %784 = vst [vmem:[#allocation2 + $0x10] sm:$0xf] %v782
        %785 = vst [vmem:[#allocation2 + $0x18] sm:$0xf] %v783
        %v786 = vld [vmem:[#allocation2] sm:$0xff]
        %v787 = vld [vmem:[#allocation2 + $0x8] sm:$0xff]
        %v788 = vld [vmem:[#allocation2 + $0x10] sm:$0xf]
        %v789 = vld [vmem:[#allocation2 + $0x18] sm:$0xf]
        %v790 = vld [vmem:[%s4] sm:$0xff]
        %v791 = vld [vmem:[%s4 + $0x8] sm:$0xff]
        %v792 = vld [vmem:[%s4 + $0x10] sm:$0xff]
        %v793 = vld [vmem:[%s4 + $0x18] sm:$0xff]
        %v794 = vld [vmem:[%s4 + $0x20] sm:$0xf]
        %vm795 = vcmask 97280
        %v797 = vsel %vm795, %v790, 0
        %v800 = vsel %vm795, %v791, 0
        %v803 = vsel %vm795, %v792, 0
        %v806 = vsel %vm795, %v793, 0
        %v809 = vsel %vm795, %v794, 0
        %v812 = vsel %vm282, %v788, 0
        %v815 = vsel %vm282, %v789, 0
        %817 = vmatprep.subr.mxu0 %v787
        %818 = vmatpush1.msra.mxu0 %v786
        %819 = vmatprep.subr.mxu0 %v815
        %820 = vmatpush1.msra.mxu0 %v812
        %821 = vmatprep.subr.mxu0 0.0
        %822 = vmatpush1.msra.mxu0 0.0
        %823 = vmatprep.subr.mxu0 0.0
        %824 = vmatpush1.msra.mxu0 0.0
        %825 = vmatprep.subr.mxu0 0.0
        %826 = vmatpush1.msra.mxu0 0.0
        %827 = vmatprep.subr.mxu0 0.0
        %828 = vmatpush1.msra.mxu0 0.0
        %829 = vmatprep.subr.mxu0 0.0
        %830 = vmatpush1.msra.mxu0 0.0
        %831 = vmatprep.subr.mxu0 0.0
        %832 = vmatpush1.msra.mxu0 0.0
        %833 = vmatprep.subr.mxu0 0.0
        %834 = vmatpush1.msra.mxu0 0.0
        %835 = vmatprep.subr.mxu0 0.0
        %836 = vmatpush1.msra.mxu0 0.0
        %837 = vmatprep.subr.mxu0 0.0
        %838 = vmatpush1.msra.mxu0 0.0
        %839 = vmatprep.subr.mxu0 0.0
        %840 = vmatpush1.msra.mxu0 0.0
        %841 = vmatprep.subr.mxu0 0.0
        %842 = vmatpush1.msra.mxu0 0.0
        %843 = vmatprep.subr.mxu0 0.0
        %844 = vmatpush1.msra.mxu0 0.0
        %845 = vmatprep.subr.mxu0 0.0
        %846 = vmatpush1.msra.mxu0 0.0
        %847 = vmatprep.subr.mxu0 0.0
        %848 = vmatpush1.msra.mxu0 0.0
        %849 = vmatprep.subr.mxu0 0.0
        %850 = vmatpush1.msra.mxu0 0.0
        %851 = vmatprep.subr.mxu0 0.0
        %852 = vmatpush1.msra.mxu0 0.0
        %853 = vmatprep.subr.mxu0 0.0
        %854 = vmatpush1.msra.mxu0 0.0
        %855 = vmatprep.subr.mxu0 0.0
        %856 = vmatpush1.msra.mxu0 0.0
        %857 = vmatprep.subr.mxu0 0.0
        %858 = vmatpush1.msra.mxu0 0.0
        %859 = vmatprep.subr.mxu0 0.0
        %860 = vmatpush1.msra.mxu0 0.0
        %861 = vmatprep.subr.mxu0 0.0
        %862 = vmatpush1.msra.mxu0 0.0
        %863 = vmatprep.subr.mxu0 0.0
        %864 = vmatpush1.msra.mxu0 0.0
        %865 = vmatprep.subr.mxu0 0.0
        %866 = vmatpush1.msra.mxu0 0.0
        %867 = vmatprep.subr.mxu0 0.0
        %868 = vmatpush1.msra.mxu0 0.0
        %869 = vmatprep.subr.mxu0 0.0
        %870 = vmatpush1.msra.mxu0 0.0
        %871 = vmatprep.subr.mxu0 0.0
        %872 = vmatpush1.msra.mxu0 0.0
        %873 = vmatprep.subr.mxu0 0.0
        %874 = vmatpush1.msra.mxu0 0.0
        %875 = vmatprep.subr.mxu0 0.0
        %876 = vmatpush1.msra.mxu0 0.0
        %877 = vmatprep.subr.mxu0 0.0
        %878 = vmatpush1.msra.mxu0 0.0
        %879 = vmatprep.subr.mxu0 0.0
        %880 = vmatpush1.msra.mxu0 0.0
        %881 = vmatprep.mubr.f32.mxu0 0.0
        %882 = vmatmul.mubr.f32.gmra.mrb[0].mxu0 %v797
        %v883 = vpop.f32.mrb[0].mxu0
        %v884 = vadd.f32 0.0, %v883
        %v885 = vpop.f32.mrb[0].mxu0
        %v886 = vadd.f32 0.0, %v885
        %887 = vmatprep.mubr.f32.mxu0 0.0
        %888 = vmatmul.mubr.f32.gmra.mrb[0].mxu0 %v800
        %v889 = vpop.f32.mrb[0].mxu0
        %v890 = vadd.f32 0.0, %v889
        %v891 = vpop.f32.mrb[0].mxu0
        %v892 = vadd.f32 0.0, %v891
        %893 = vmatprep.mubr.f32.mxu0 0.0
        %894 = vmatmul.mubr.f32.gmra.mrb[0].mxu0 %v803
        %v895 = vpop.f32.mrb[0].mxu0
        %v896 = vadd.f32 0.0, %v895
        %v897 = vpop.f32.mrb[0].mxu0
        %v898 = vadd.f32 0.0, %v897
        %899 = vmatprep.mubr.f32.mxu0 0.0
        %900 = vmatmul.mubr.f32.gmra.mrb[0].mxu0 %v806
        %v901 = vpop.f32.mrb[0].mxu0
        %v902 = vadd.f32 0.0, %v901
        %v903 = vpop.f32.mrb[0].mxu0
        %v904 = vadd.f32 0.0, %v903
        %905 = vmatprep.mubr.f32.mxu0 0.0
        %906 = vmatmul.mubr.f32.gmra.mrb[0].mxu0 %v809
        %v907 = vpop.f32.mrb[0].mxu0
        %v908 = vadd.f32 0.0, %v907
        %v909 = vpop.f32.mrb[0].mxu0
        %v910 = vadd.f32 0.0, %v909
        %911 = vdwg.mxu0
        %914 = vrot.lane.b32.xlu0 %v884, 1
        %v915 = vpop.permute.xlu0 %914
        %916 = vrot.lane.b32.xlu0 %v886, 1
        %v917 = vpop.permute.xlu0 %916
        %v918 = vsel %vm390, %v915, %v917
        %v921 = vsel %vm390, 0.0, %v915
        %v922 = vmul.f32 %v921, %v399
        %v923 = vmul.f32 %v918, %v403
        %v924 = vrot.slane %v884, 4
        %v925 = vrot.slane %v886, 4
        %v928 = vadd.f32 %v922, %v924
        %v929 = vadd.f32 %v923, %v925
        %932 = vrot.lane.b32.xlu0 %v890, 127
        %v933 = vpop.permute.xlu0 %932
        %934 = vrot.lane.b32.xlu0 %v892, 127
        %v935 = vpop.permute.xlu0 %934
        %v936 = vsel %vm420, %v933, %v935
        %v939 = vsel %vm420, %v935, 0.0
        %v940 = vmul.f32 %v936, %v429
        %v941 = vmul.f32 %v939, %v433
        %v942 = vadd.f32 %v928, %v940
        %v943 = vadd.f32 %v929, %v941
        %946 = vrot.lane.b32.xlu0 %v942, 16
        %v947 = vpop.permute.xlu0 %946
        %948 = vrot.lane.b32.xlu0 %v943, 16
        %v949 = vpop.permute.xlu0 %948
        %v950 = vsel %vm446, %v947, %v949
        %v953 = vsel %vm446, 0.0, %v947
        %v954 = vrot.slane %v890, 4
        %v955 = vrot.slane %v892, 4
        %956 = vrot.lane.b32.xlu0 %v954, 1
        %v957 = vpop.permute.xlu0 %956
        %958 = vrot.lane.b32.xlu0 %v955, 1
        %v959 = vpop.permute.xlu0 %958
        %v960 = vsel %vm390, %v957, %v959
        %v963 = vsel %vm390, 0.0, %v957
        %v964 = vmul.f32 %v963, %v399
        %v965 = vmul.f32 %v960, %v403
        %v966 = vadd.f32 %v964, %v896
        %v967 = vadd.f32 %v965, %v898
        %970 = vrot.lane.b32.xlu0 %v896, 127
        %v971 = vpop.permute.xlu0 %970
        %972 = vrot.lane.b32.xlu0 %v898, 127
        %v973 = vpop.permute.xlu0 %972
        %v974 = vsel %vm420, %v971, %v973
        %v977 = vsel %vm420, %v973, 0.0
        %v978 = vmul.f32 %v974, %v429
        %v979 = vmul.f32 %v977, %v433
        %v982 = vrot.slane %v978, 4
        %v983 = vrot.slane %v979, 4
        %v986 = vadd.f32 %v966, %v982
        %v987 = vadd.f32 %v967, %v983
        %v988 = vadd.f32 %v953, %v986
        %v989 = vadd.f32 %v950, %v987
        %992 = vrot.lane.b32.xlu0 %v902, 1
        %v993 = vpop.permute.xlu0 %992
        %994 = vrot.lane.b32.xlu0 %v904, 1
        %v995 = vpop.permute.xlu0 %994
        %v996 = vsel %vm390, %v993, %v995
        %v999 = vsel %vm390, 0.0, %v993
        %v1000 = vmul.f32 %v999, %v399
        %v1001 = vmul.f32 %v996, %v403
        %v1002 = vrot.slane %v902, 4
        %v1003 = vrot.slane %v904, 4
        %v1006 = vadd.f32 %v1000, %v1002
        %v1007 = vadd.f32 %v1001, %v1003
        %1010 = vrot.lane.b32.xlu0 %v908, 127
        %v1011 = vpop.permute.xlu0 %1010
        %1012 = vrot.lane.b32.xlu0 %v910, 127
        %v1013 = vpop.permute.xlu0 %1012
        %v1014 = vsel %vm420, %v1011, %v1013
        %v1017 = vsel %vm420, %v1013, 0.0
        %v1018 = vmul.f32 %v1014, %v429
        %v1019 = vmul.f32 %v1017, %v433
        %v1020 = vadd.f32 %v1006, %v1018
        %v1021 = vadd.f32 %v1007, %v1019
        %1024 = vrot.lane.b32.xlu0 %v1020, 112
        %v1025 = vpop.permute.xlu0 %1024
        %1026 = vrot.lane.b32.xlu0 %v1021, 112
        %v1027 = vpop.permute.xlu0 %1026
        %v1028 = vsel %vm525, %v1025, %v1027
        %v1031 = vsel %vm525, %v1027, 0.0
        %v1032 = vadd.f32 %v988, %v1028
        %v1033 = vadd.f32 %v989, %v1031
        %v1034 = vmax.f32 %v1032, 0.0
        %v1035 = vmax.f32 %v1033, 0.0
        %v1038 = vrot.slane %v1034, 4
        %v1039 = vrot.slane %v1035, 4
        %1042 = vst [vmem:[#allocation2 + $0x10] sm:$0xf0] %v1038
        %1043 = vst [vmem:[#allocation2 + $0x18] sm:$0xf0] %v1039
        %v1044 = vld [vmem:[%s5] sm:$0xf]
        %v1045 = vld [vmem:[#allocation2] sm:$0xff]
        %v1046 = vld [vmem:[#allocation2 + $0x8] sm:$0xff]
        %v1047 = vld [vmem:[#allocation2 + $0x10] sm:$0xff]
        %v1048 = vld [vmem:[#allocation2 + $0x18] sm:$0xff]
        %v1050 = vsel %vm446, %v1044, 0
        %1052 = vmatprep.subr.mxu0 %v1046
        %1053 = vmatpush1.msra.mxu0 %v1045
        %1054 = vmatprep.subr.mxu0 %v1048
        %1055 = vmatpush1.msra.mxu0 %v1047
        %1056 = vmatprep.subr.mxu0 0.0
        %1057 = vmatpush1.msra.mxu0 0.0
        %1058 = vmatprep.subr.mxu0 0.0
        %1059 = vmatpush1.msra.mxu0 0.0
        %1060 = vmatprep.subr.mxu0 0.0
        %1061 = vmatpush1.msra.mxu0 0.0
        %1062 = vmatprep.subr.mxu0 0.0
        %1063 = vmatpush1.msra.mxu0 0.0
        %1064 = vmatprep.subr.mxu0 0.0
        %1065 = vmatpush1.msra.mxu0 0.0
        %1066 = vmatprep.subr.mxu0 0.0
        %1067 = vmatpush1.msra.mxu0 0.0
        %1068 = vmatprep.subr.mxu0 0.0
        %1069 = vmatpush1.msra.mxu0 0.0
        %1070 = vmatprep.subr.mxu0 0.0
        %1071 = vmatpush1.msra.mxu0 0.0
        %1072 = vmatprep.subr.mxu0 0.0
        %1073 = vmatpush1.msra.mxu0 0.0
        %1074 = vmatprep.subr.mxu0 0.0
        %1075 = vmatpush1.msra.mxu0 0.0
        %1076 = vmatprep.subr.mxu0 0.0
        %1077 = vmatpush1.msra.mxu0 0.0
        %1078 = vmatprep.subr.mxu0 0.0
        %1079 = vmatpush1.msra.mxu0 0.0
        %1080 = vmatprep.subr.mxu0 0.0
        %1081 = vmatpush1.msra.mxu0 0.0
        %1082 = vmatprep.subr.mxu0 0.0
        %1083 = vmatpush1.msra.mxu0 0.0
        %1084 = vmatprep.subr.mxu0 0.0
        %1085 = vmatpush1.msra.mxu0 0.0
        %1086 = vmatprep.subr.mxu0 0.0
        %1087 = vmatpush1.msra.mxu0 0.0
        %1088 = vmatprep.subr.mxu0 0.0
        %1089 = vmatpush1.msra.mxu0 0.0
        %1090 = vmatprep.subr.mxu0 0.0
        %1091 = vmatpush1.msra.mxu0 0.0
        %1092 = vmatprep.subr.mxu0 0.0
        %1093 = vmatpush1.msra.mxu0 0.0
        %1094 = vmatprep.subr.mxu0 0.0
        %1095 = vmatpush1.msra.mxu0 0.0
        %1096 = vmatprep.subr.mxu0 0.0
        %1097 = vmatpush1.msra.mxu0 0.0
        %1098 = vmatprep.subr.mxu0 0.0
        %1099 = vmatpush1.msra.mxu0 0.0
        %1100 = vmatprep.subr.mxu0 0.0
        %1101 = vmatpush1.msra.mxu0 0.0
        %1102 = vmatprep.subr.mxu0 0.0
        %1103 = vmatpush1.msra.mxu0 0.0
        %1104 = vmatprep.subr.mxu0 0.0
        %1105 = vmatpush1.msra.mxu0 0.0
        %1106 = vmatprep.subr.mxu0 0.0
        %1107 = vmatpush1.msra.mxu0 0.0
        %1108 = vmatprep.subr.mxu0 0.0
        %1109 = vmatpush1.msra.mxu0 0.0
        %1110 = vmatprep.subr.mxu0 0.0
        %1111 = vmatpush1.msra.mxu0 0.0
        %1112 = vmatprep.subr.mxu0 0.0
        %1113 = vmatpush1.msra.mxu0 0.0
        %1114 = vmatprep.subr.mxu0 0.0
        %1115 = vmatpush1.msra.mxu0 0.0
        %1116 = vmatprep.mubr.f32.mxu0 0.0
        %1117 = vmatmul.mubr.f32.gmra.mrb[0].mxu0 %v1050
        %v1118 = vpop.f32.mrb[0].mxu0
        %v1119 = vadd.f32 %v250, %v1118
        %v1120 = vpop.f32.mrb[0].mxu0
        %v1121 = vadd.f32 %v252, %v1120
        %1122 = vdwg.mxu0
        %v1125 = vcombine.low %v1119, %v1121
        %1127 = vst [vmem:[%s244] sm:$0xff] %v1125
        %s1128 = sand.u32 %s159, 1
        %s1129 = scalar_lea.sflag [#allocation4], %s1128
        %s1130 = sand.u32 %s159, 1
        %s1131 = smul.addr %s1130, 8
        %s1132 = scalar_lea.vmem [#allocation3], %s1131
        // Predicated region
        $region45: #{tpu_custom_call.1} parent=43 // pred_check
          %p1133 = pneg %p169
        $region46: #{tpu_custom_call.1} parent=43 // pred_check_branch
          %1135 = sbr.rel (%p1133) target = $region48
        $region47: #{tpu_custom_call.1} parent=43 // pred_region
          %s1137 = ssub.s32 128, 128
          %1138 = vsyncadd %s1129, %s1137
          %s1139 = smul.addr %s20, 2
          %s1140 = smul.addr %s1139, 64
          %s1141 = scalar_lea.hbm %s6, %s1140
          %s1143 = sshll.u32 %s1132, 4
          %s1144 = int_to_ptr.vmem [resolvable:$true] %s1143
          %1146 = dma.vmem_to_hbm [thread:$0]  %s1144, 128, %s1141, %s1129
        $region48: #{tpu_custom_call.1} parent=43 // pred_fallthru
          _
      $region44: #{tpu_custom_call.1} parent=5 // pred_fallthru
        _
      %p1147 = scmp.le.s32.totalorder 2, %s15
      // Predicated region
      $region49: #{tpu_custom_call.1} parent=5 // pred_check
        %p1148 = pneg %p1147
      $region50: #{tpu_custom_call.1} parent=5 // pred_check_branch
        %1150 = sbr.rel (%p1148) target = $region52
      $region51: #{tpu_custom_call.1} parent=5 // pred_region
        %s1151 = ssub.s32 %s15, 2
        // Predicated region
        $region53: #{tpu_custom_call.1} parent=51 // pred_check
          %p1152 = pneg %p175
        $region54: #{tpu_custom_call.1} parent=51 // pred_check_branch
          %1154 = sbr.rel (%p1152) target = $region56
        $region55: #{tpu_custom_call.1} parent=51 // pred_region
          %s1155 = sand.u32 %s160, 1
          %s1156 = scalar_lea.sflag [#allocation4], %s1155
          %s1157 = sand.u32 %s160, 1
          %s1158 = smul.addr %s1157, 8
          %s1159 = scalar_lea.vmem [#allocation3], %s1158
          %1160 = dma.done %s1156, 128
        $region56: #{tpu_custom_call.1} parent=51 // pred_fallthru
          _
      $region52: #{tpu_custom_call.1} parent=5 // pred_fallthru
        _
    $region6: #{tpu_custom_call.1} parent=1 // loop_footer
      %s19 = sadd.s32 1, %s15
    $region7: #{tpu_custom_call.1} parent=1 // loop_footer_branch
      %14 = sbr.rel target = $region3
    $region8: #{tpu_custom_call.1} parent=1 // loop_exit
      _
    %1161 = vsyncpa [#allocation4], 1
    %s1162 = scalar_lea.sflag [#allocation4], 1
    %1163 = vsyncpa %s1162, 1

</llo_original>
